<compile_context>
chip_gen: v5e
topology: v5e:2x2
jax: 0.10.0
libtpu: 0.0.40
codegen_flags: <defaults>
</compile_context>

<pallas_src>
import functools
import math
import numpy as np
import jax
import jax.numpy as jnp
from jax import lax
from jax.experimental import pallas as pl
from jax.experimental.pallas import tpu as pltpu


# ---------------- glue: kaiser-windowed sinc filter (mirrors BigVGAN) ---------
def kaiser_sinc_filter1d(cutoff, half_width, kernel_size):
    even = kernel_size % 2 == 0
    half_size = kernel_size // 2
    delta_f = 4.0 * half_width
    A = 2.285 * (half_size - 1) * np.pi * delta_f + 7.95
    if A > 50.0:
        beta = 0.1102 * (A - 8.7)
    elif A >= 21.0:
        beta = 0.5842 * (A - 21.0) ** 0.4 + 0.07886 * (A - 21.0)
    else:
        beta = 0.0
    window = np.kaiser(kernel_size, beta)
    if even:
        time = np.arange(-half_size, half_size) + 0.5
    else:
        time = np.arange(kernel_size) - half_size
    if cutoff == 0:
        filt = np.zeros_like(time)
    else:
        filt = 2.0 * cutoff * window * np.sinc(2.0 * cutoff * time)
        filt = filt / filt.sum()
    return filt.astype(np.float32)


# ---------------- roll-direction probe (memoized, run eagerly once) -----------
@functools.lru_cache(maxsize=1)
def _roll_matches_jnp():
    """pltpu.roll follows jnp.roll (out[i] = x[i-shift]); probe once to be robust."""
    def k(x_ref, o_ref):
        o_ref[...] = pltpu.roll(x_ref[...], 1, 1)

    x = jnp.tile(jnp.arange(128, dtype=jnp.float32)[None, :], (8, 1))
    y = pl.pallas_call(k, out_shape=jax.ShapeDtypeStruct((8, 128), jnp.float32))(x)
    v = int(jax.block_until_ready(y)[0, 0])
    assert v in (127, 1), f"unexpected roll semantics probe value {v}"
    return v == 127


# ---------------- Pallas kernel ------------------------------------------------
def _make_amp_block2_kernel(C, T, GT, dilations, f_up, f_dn, roll_like_jnp):
    """Kernel works on a (C, GT) tile = G batch segments of length T folded on lanes."""
    dilations = tuple(int(d) for d in dilations)
    L = len(dilations)
    # polyphase FIR taps, baked in as python constants
    ce = [2.0 * float(f_up[2 * p + 1]) for p in range(6)]   # -> even output phase u_e
    co = [2.0 * float(f_up[2 * p]) for p in range(6)]       # -> odd  output phase u_o
    de = [float(f_dn[2 * q + 1]) for q in range(6)]         # hits a_e[t + q - 2]
    do = [float(f_dn[2 * q]) for q in range(6)]             # hits a_o[t + q - 3]
    pow2 = (T & (T - 1)) == 0

    def kernel(x_ref, w_ref, par_ref, o_ref):
        # per-lane local time index within each length-T batch segment: (1, GT),
        # broadcast over channels inside the selects.
        it = lax.broadcasted_iota(jnp.int32, (1, GT), 1)
        t_loc = (it & (T - 1)) if pow2 else (it % T)

        masks = {}

        def valid(s):
            m = masks.get(s)
            if m is None:
                ts = t_loc + s
                m = (ts >= 0) & (ts < T)
                masks[s] = m
            return m

        def shift_seg(y, s, fill):
            # out[:, g] = y[:, g + s] while g+s stays inside its segment, else fill[:, g]
            if s == 0:
                return y
            amt = (-s) % GT if roll_like_jnp else s % GT
            return jnp.where(valid(s), pltpu.roll(y, amt, 1), fill)

        x = x_ref[0]                                          # (C, GT)
        for l in range(L):
            d = dilations[l]
            bias = par_ref[l, 0]                              # (C, 1)
            alpha = par_ref[l, 1]                             # exp(alpha)        (C, 1)
            inv_b = par_ref[l, 2]                             # 1/(exp(beta)+eps) (C, 1)

            # --- UpSample1d(ratio=2, K=12): streamed polyphase FIR.  Shifted copies
            #     of x by -3..3 are produced one at a time (replicate edges via the
            #     previous shift as fill) and FMA'd straight into u_e / u_o.
            u_e = ce[2] * x
            u_o = co[3] * x
            prev = x
            for s in (1, 2, 3):                               # right edge -> x[T-1]
                cur = shift_seg(x, s, prev)
                if 0 <= 2 - s <= 5:
                    u_e = u_e + ce[2 - s] * cur
                u_o = u_o + co[3 - s] * cur
                prev = cur
            prev = x
            for s in (-1, -2, -3):                            # left edge -> x[0]
                cur = shift_seg(x, s, prev)
                u_e = u_e + ce[2 - s] * cur
                if 0 <= 3 - s <= 5:
                    u_o = u_o + co[3 - s] * cur
                prev = cur

            # --- SnakeBeta (alpha_logscale): u + 1/(exp(beta)+eps) * sin(exp(alpha)*u)^2
            a_e = u_e + inv_b * jnp.square(jnp.sin(u_e * alpha))
            a_o = u_o + inv_b * jnp.square(jnp.sin(u_o * alpha))

            # --- DownSample1d(ratio=2, K=12): streamed polyphase FIR.  Clamp fills
            #     follow the interleaved signal: left edge -> a_e[0], right -> a_o[T-1].
            dn = de[2] * a_e + do[3] * a_o
            cur = shift_seg(a_e, -1, a_e)
            dn = dn + de[1] * cur
            ae_m2 = shift_seg(a_e, -2, cur)                   # == a_e[0] on left edge
            dn = dn + de[0] * ae_m2
            cur = shift_seg(a_o, 1, a_o)
            dn = dn + do[4] * cur
            ao_p2 = shift_seg(a_o, 2, cur)                    # == a_o[T-1] on right edge
            dn = dn + do[5] * ao_p2
            for s in (1, 2, 3):                               # cross-phase right fills
                dn = dn + de[s + 2] * shift_seg(a_e, s, ao_p2)
            for s in (-1, -2, -3):                            # cross-phase left fills
                dn = dn + do[s + 3] * shift_seg(a_o, s, ae_m2)

            # --- weight-normed dilated Conv1d (k=3, zero pad d): three accumulated
            #     (C,C)@(C,GT) bf16 MXU dots (f32 accumulation), no sublane concat.
            y = jnp.dot(w_ref[l, 1], dn.astype(jnp.bfloat16),
                        preferred_element_type=jnp.float32)
            y = y + jnp.dot(w_ref[l, 0],
                            shift_seg(dn, -d, 0.0).astype(jnp.bfloat16),
                            preferred_element_type=jnp.float32)
            y = y + jnp.dot(w_ref[l, 2],
                            shift_seg(dn, d, 0.0).astype(jnp.bfloat16),
                            preferred_element_type=jnp.float32)
            x = y + bias + x                                  # residual

        o_ref[0] = x

    return kernel


def amp_block2_pallas(x, w_layers, bias, alpha, beta, f_up, f_dn, dilations):
    """x: (B, C, T) f32; w_layers: (L, Cout, Cin, 3) effective (weight-normed) weights."""
    B, C, T = x.shape
    L = len(dilations)
    LANE = 128

    # Fold G batches onto the lane axis so every block's last dim is a multiple of 128.
    G = LANE // math.gcd(T, LANE)
    if B % G != 0:
        raise ValueError(f"batch {B} must be a multiple of {G} for lane-dense folding (T={T})")
    NG = B // G
    GT = G * T
    # TODO(synk): for production shapes (C>=256, T in the thousands) add a time-tiling
    # grid axis (128-multiple tile + 5+2*max(d) halo) sized for v7x's 64 MiB VMEM and
    # set pltpu.CompilerParams(vmem_limit_bytes=...) explicitly.

    roll_like_jnp = _roll_matches_jnp()   # memoized: one probe per process
    kernel = _make_amp_block2_kernel(
        C, T, GT, tuple(int(d) for d in dilations),
        [float(v) for v in f_up], [float(v) for v in f_dn], roll_like_jnp)

    # (NG, C, G*T): G batch segments side by side on the lane (time) axis.
    xg = (x.astype(jnp.float32)
            .reshape(NG, G, C, T).transpose(0, 2, 1, 3).reshape(NG, C, GT))

    # Per-tap conv weights: w_k[l, k, co, ci] = W[l, co, ci, k], cast to bf16 for the MXU.
    w_k = jnp.transpose(w_layers, (0, 3, 1, 2)).astype(jnp.bfloat16)   # (L, 3, C, C)

    # One packed params array; activation transcendentals precomputed here.
    params = jnp.stack(
        [bias.astype(jnp.float32),
         jnp.exp(alpha.astype(jnp.float32)),
         1.0 / (jnp.exp(beta.astype(jnp.float32)) + 1e-9)],
        axis=1)[:, :, :, None]                                   # (L, 3, C, 1)

    out_g = pl.pallas_call(
        kernel,
        out_shape=jax.ShapeDtypeStruct((NG, C, GT), jnp.float32),
        grid=(NG,),
        in_specs=[
            pl.BlockSpec((1, C, GT), lambda g: (g, 0, 0)),
            pl.BlockSpec((L, 3, C, C), lambda g: (0, 0, 0, 0)),
            pl.BlockSpec((L, 3, C, 1), lambda g: (0, 0, 0, 0)),
        ],
        out_specs=pl.BlockSpec((1, C, GT), lambda g: (g, 0, 0)),
        input_output_aliases={0: 0},   # x is fully consumed; reuse its HBM buffer
        compiler_params=pltpu.CompilerParams(dimension_semantics=("parallel",)),
    )(xg, w_k, params)

    return out_g.reshape(NG, C, G, T).transpose(0, 2, 1, 3).reshape(B, C, T)


# ---------------- pure-JAX reference (mirrors the PyTorch ops directly) ------
def amp_block2_reference(x, w_layers, bias, alpha, beta, f_up, f_dn, dilations):
    B, C, T = x.shape
    out = x
    for l, d in enumerate(dilations):
        xi = out
        # UpSample1d: replicate pad 5, conv_transpose1d(stride=2), *2, crop 15/15
        xp = jnp.pad(xi, ((0, 0), (0, 0), (5, 5)), mode="edge")
        Lp = T + 10
        yfull = jnp.zeros((B, C, 2 * Lp + 10), jnp.float32)
        for k in range(12):
            yfull = yfull.at[:, :, k:k + 2 * Lp:2].add(xp * float(f_up[k]))
        u = 2.0 * yfull[:, :, 15:15 + 2 * T]
        # SnakeBeta (logscale)
        al = jnp.exp(alpha[l])[None, :, None]
        be = jnp.exp(beta[l])[None, :, None]
        a = u + (1.0 / (be + 1e-9)) * jnp.sin(u * al) ** 2
        # DownSample1d: replicate pad (5, 6), conv1d stride 2
        ap = jnp.pad(a, ((0, 0), (0, 0), (5, 6)), mode="edge")
        dn = jnp.zeros((B, C, T), jnp.float32)
        for k in range(12):
            dn = dn + float(f_dn[k]) * ap[:, :, k::2][:, :, :T]
        # dilated conv (k=3, padding=d) + residual
        cp = jnp.pad(dn, ((0, 0), (0, 0), (d, d)))
        y = bias[l][None, :, None] + sum(
            jnp.einsum("oi,bit->bot", w_layers[l, :, :, k], cp[:, :, k * d:k * d + T],
                       precision=lax.Precision.HIGHEST)
            for k in range(3))
        out = y + xi
    return out


if __name__ == "__main__":
    B, C, T = 4, 8, 64           # small shapes; B=4 -> 2 parallel grid blocks (v7x)
    L_layers = 3
    dilations = (1, 3, 5)
    Kc = 3

    key = jax.random.PRNGKey(0)
    k0, k1, k2, k3, k4, k5 = jax.random.split(key, 6)

    x = jax.random.normal(k0, (B, C, T), jnp.float32)

    # weight_norm(Conv1d(C, C, 3, dilation=d)): effective W = g * v / ||v||_(in,k)
    v = 0.01 * jax.random.normal(k1, (L_layers, C, C, Kc), jnp.float32)
    g = 0.05 * (1.0 + 0.1 * jax.random.normal(k2, (L_layers, C), jnp.float32))
    vnorm = jnp.sqrt(jnp.sum(v * v, axis=(2, 3), keepdims=True))
    w_layers = (g[:, :, None, None] / vnorm) * v              # (L, Cout, Cin, 3)
    bias = 0.05 * jax.random.normal(k3, (L_layers, C), jnp.float32)

    # SnakeBeta parameters (snake_logscale=True)
    alpha = 0.1 * jax.random.normal(k4, (L_layers, C), jnp.float32)
    beta = 0.1 * jax.random.normal(k5, (L_layers, C), jnp.float32)

    # Anti-alias filters for Activation1d (ratio=2, kernel_size=12)
    f_up = kaiser_sinc_filter1d(0.5 / 2, 0.6 / 2, 12)
    f_dn = kaiser_sinc_filter1d(0.5 / 2, 0.6 / 2, 12)

    y = amp_block2_pallas(x, w_layers, bias, alpha, beta, f_up, f_dn, dilations)
    y = jax.block_until_ready(y)

    y_ref = amp_block2_reference(x, w_layers, bias, alpha, beta, f_up, f_dn, dilations)
    err = float(jnp.max(jnp.abs(y - y_ref)))
    # bf16 MXU operands loosen the tolerance vs the f32 reference (acceptable for audio).
    assert err < 5e-2, f"mismatch vs reference: {err}"
    print("KERNEL_OK")
</pallas_src>

<mosaic_0001>
module attributes {stable_mosaic.version = 11 : i64} {
  func.func @k(%arg0: memref<8x128xf32, #tpu.memory_space<vmem>>, %arg1: memref<8x128xf32, #tpu.memory_space<vmem>>) attributes {dimension_semantics = [], scalar_prefetch = 0 : i64, scratch_operands = 0 : i64, tpu.core_type = #tpu.core_type<tc>} {
    %c0 = arith.constant 0 : index
    %c0_0 = arith.constant 0 : index
    %0 = vector.load %arg0[%c0, %c0_0] : memref<8x128xf32, #tpu.memory_space<vmem>>, vector<8x128xf32>
    %c1_i32 = arith.constant 1 : i32
    %1 = tpu.dynamic_rotate %0 by %c1_i32 dim 1 : vector<8x128xf32>, i32 -> vector<8x128xf32>
    %c0_1 = arith.constant 0 : index
    %c0_2 = arith.constant 0 : index
    %2 = vector.load %arg1[%c0_1, %c0_2] : memref<8x128xf32, #tpu.memory_space<vmem>>, vector<8x128xf32>
    tpu.vector_store %arg1[%c0_1, %c0_2], %1 {strides = array<i32>} : memref<8x128xf32, #tpu.memory_space<vmem>>, vector<8x128xf32>,
    return
  }
}

</mosaic_0001>

<llo_original>
// kernel: tpu_custom_call.1
$region0: #{tpu_custom_call.1}
  #allocation0 [shape = 'u32[]', space=smem, size = 0x4, offset = 0x4, fixed_abs, tag = 'smem constant byte address 0x4 - core index']
  #allocation1 [shape = 'u32[72,128]{1,0:T(1,128)}', space=vmem, size = 0x9000, scoped, tag = 'internal scratch']
  %s0 = inlined_call_operand.hbm [shape: f32[8,128], index: 0, kind: input, shape index: {}]
  %s1 = inlined_call_operand.hbm [shape: f32[8,128], index: 1, kind: output, shape index: {}]
  %s2 = sld [smem:[#allocation0]]
  $region18: #{tpu_custom_call.1} parent=0
    _
  %s4 = ssub.s32 1, %s2
  %s5 = scalar_select 0, %s4, %s2
  $region1: #{tpu_custom_call.1} parent=0
    #allocation2 [shape = 'u8[4096]{0}', space=vmem, size = 0x1000, scoped, tag = 'input window, operand 0, single buffered']
    #allocation3 [shape = 's32[1]{0}', space=sflag, size = 0x4, scoped, tag = 'scoped memory for tpu_custom_call.1']
    #allocation4 [shape = 's32[1]{0}', space=sflag, size = 0x4, scoped, tag = 'scoped memory for tpu_custom_call.1']
    #allocation5 [shape = 'u8[4096]{0}', space=vmem, size = 0x1000, scoped, tag = 'output window, operand 0, single buffered']
    %6 = vsyncpa [#allocation3], 0
    %7 = vsyncpa [#allocation4], 0
    // Predicated region
    $region2: #{tpu_custom_call.1} parent=1 // pred_check
      _
    $region3: #{tpu_custom_call.1} parent=1 // pred_check_branch
      %9 = sbr.rel (0) target = $region5
    $region4: #{tpu_custom_call.1} parent=1 // pred_region
      %11 = vsyncadd [#allocation3], 0
      %s13 = sshll.u32 %s0, 4
      %s14 = int_to_ptr.hbm [resolvable:$true] %s13
      %s15 = sshll.u32 [#allocation2], 4
      %s16 = int_to_ptr.vmem [resolvable:$true] %s15
      %18 = dma.hbm_to_vmem [thread:$0]  %s14, 128, %s16, [#allocation3]
    $region5: #{tpu_custom_call.1} parent=1 // pred_fallthru
      _
    // Predicated region
    $region6: #{tpu_custom_call.1} parent=1 // pred_check
      _
    $region7: #{tpu_custom_call.1} parent=1 // pred_check_branch
      %20 = sbr.rel (0) target = $region9
    $region8: #{tpu_custom_call.1} parent=1 // pred_region
      %22 = dma.done [#allocation3], 128
    $region9: #{tpu_custom_call.1} parent=1 // pred_fallthru
      _
    %v23 = vld [vmem:[#allocation2] sm:$0xff]
    %24 = vrot.lane.b32.xlu0 %v23, 1
    %v25 = vpop.permute.xlu0 %24
    %26 = vst [vmem:[#allocation5] sm:$0xff] %v25
    // Predicated region
    $region10: #{tpu_custom_call.1} parent=1 // pred_check
      _
    $region11: #{tpu_custom_call.1} parent=1 // pred_check_branch
      %28 = sbr.rel (0) target = $region13
    $region12: #{tpu_custom_call.1} parent=1 // pred_region
      %30 = vsyncadd [#allocation4], 0
      %s32 = sshll.u32 [#allocation5], 4
      %s33 = int_to_ptr.vmem [resolvable:$true] %s32
      %s34 = sshll.u32 %s1, 4
      %s35 = int_to_ptr.hbm [resolvable:$true] %s34
      %37 = dma.vmem_to_hbm [thread:$0]  %s33, 128, %s35, [#allocation4]
    $region13: #{tpu_custom_call.1} parent=1 // pred_fallthru
      _
    // Predicated region
    $region14: #{tpu_custom_call.1} parent=1 // pred_check
      _
    $region15: #{tpu_custom_call.1} parent=1 // pred_check_branch
      %39 = sbr.rel (0) target = $region17
    $region16: #{tpu_custom_call.1} parent=1 // pred_region
      %41 = dma.done [#allocation4], 128
    $region17: #{tpu_custom_call.1} parent=1 // pred_fallthru
      _
    %42 = vsyncpa [#allocation3], 1
    %43 = vsyncpa [#allocation4], 1

</llo_original>
